<compile_context>
chip_gen: v7x
topology: tpu7x:2x2x1
jax: 0.10.0
libtpu: 0.0.40
codegen_flags: <defaults>
</compile_context>

<pallas_src>
import functools

import jax
import jax.numpy as jnp
from jax import lax
from jax.experimental import pallas as pl
from jax.experimental.pallas import tpu as pltpu

KSIZE = 3          # SpatialAttention kernel_size=3 -> padding=1


# ----------------------------------------------------------------------------
# SpatialAttention Pallas kernel (optionally with a fused (a - b) producer)
# ----------------------------------------------------------------------------
def _sa_kernel(*refs, C, W, masked, fused):
    # refs (fused):   w_ref, a_ref, b_ref, o_ref, sum_ref, max_ref
    # refs (plain):   w_ref, a_ref,        o_ref, sum_ref, max_ref
    if fused:
        w_ref, a_ref, b_ref, o_ref, sum_ref, max_ref = refs
    else:
        w_ref, a_ref, o_ref, sum_ref, max_ref = refs
        b_ref = None
    # w_ref   : SMEM (18,) f32          -- conv1 weight, flattened (cin, kh, kw)
    # a/b_ref : VMEM (1, c_chunk, HW)   -- channel chunk, lane-dense, native dtype
    # o_ref   : VMEM (1, 1, HW)         -- attention map (written at last chunk)
    # sum_ref, max_ref : VMEM (8, HW) f32 -- full-sublane partial accumulators
    HW = o_ref.shape[-1]
    cc = a_ref.shape[1]
    c_idx = pl.program_id(1)
    last = pl.num_programs(1) - 1

    @pl.when(c_idx == 0)
    def _init():
        sum_ref[...] = jnp.zeros_like(sum_ref)
        max_ref[...] = jnp.full_like(max_ref, -jnp.inf)

    # Chunk load (+ fused producer subtraction), cast to f32 for accumulation.
    x = a_ref[0].astype(jnp.float32)                       # (cc, HW)
    if fused:
        x = x - b_ref[0].astype(jnp.float32)

    ngrp, rem = cc // 8, cc % 8

    def _accumulate(xs, xm):
        # Fold groups of 8 channel rows with full-sublane VPU adds / maxes
        # (no per-chunk cross-sublane XLU reduce).
        if ngrp > 0:
            s8 = sum_ref[...]
            m8 = max_ref[...]
            for g in range(ngrp):
                lo, hi = g * 8, (g + 1) * 8
                s8 = s8 + xs[lo:hi]
                m8 = jnp.maximum(m8, xm[lo:hi])
            sum_ref[...] = s8
            max_ref[...] = m8
        if rem > 0:   # tail rows (< 8): one small cross-sublane reduce into row 0
            ts = jnp.sum(xs[ngrp * 8:], axis=0, keepdims=True)
            tm = jnp.max(xm[ngrp * 8:], axis=0, keepdims=True)
            sum_ref[0:1, :] = sum_ref[0:1, :] + ts
            max_ref[0:1, :] = jnp.maximum(max_ref[0:1, :], tm)

    if masked:   # static: only traced when C % c_chunk != 0
        # Only the ragged last chunk pays the iota/select masking cost.
        @pl.when(c_idx != last)
        def _plain():
            _accumulate(x, x)

        @pl.when(c_idx == last)
        def _ragged():
            ch = lax.broadcasted_iota(jnp.int32, (cc, HW), 0) + c_idx * cc
            valid = ch < C
            _accumulate(jnp.where(valid, x, 0.0), jnp.where(valid, x, -jnp.inf))
    else:
        _accumulate(x, x)

    # Epilogue: 3x3 "same" conv over [avg, max] + sigmoid, on the flattened map.
    @pl.when(c_idx == last)
    def _finish():
        avg = jnp.sum(sum_ref[...], axis=0, keepdims=True) * jnp.float32(1.0 / C)
        mx = jnp.max(max_ref[...], axis=0, keepdims=True)          # (1, HW)

        # Pad once along the lane axis by W+1 on each side; every 3x3 tap is a
        # static lane-offset window of that one padded buffer. Row out-of-range
        # taps land in the zero pad; column wrap-around is masked below.
        padw = W + 1
        pad_a = jnp.pad(avg, ((0, 0), (padw, padw)))
        pad_m = jnp.pad(mx, ((0, 0), (padw, padw)))

        col = lax.broadcasted_iota(jnp.int32, (1, HW), 1) % W       # hoisted
        not_left_edge = col >= 1            # taps with dw = -1 invalid at col 0
        not_right_edge = col <= W - 2       # taps with dw = +1 invalid at col W-1

        w = [w_ref[k] for k in range(2 * KSIZE * KSIZE)]   # hoisted SMEM reads

        acc = jnp.zeros((1, HW), jnp.float32)
        for kh in range(KSIZE):
            for kw in range(KSIZE):
                d = (kh - 1) * W + (kw - 1)                # flattened displacement
                start = padw + d
                win_a = lax.slice(pad_a, (0, start), (1, start + HW))
                win_m = lax.slice(pad_m, (0, start), (1, start + HW))
                tap = w[kh * KSIZE + kw] * win_a + w[9 + kh * KSIZE + kw] * win_m
                if kw == 0:
                    tap = jnp.where(not_left_edge, tap, 0.0)
                elif kw == 2:
                    tap = jnp.where(not_right_edge, tap, 0.0)
                acc = acc + tap

        o_ref[0] = jax.nn.sigmoid(acc).astype(o_ref.dtype)


def _default_target_bytes():
    """Per-generation channel-chunk size target (amortize ~0.35 us/step overhead)."""
    try:
        kind = jax.devices()[0].device_kind.lower()
    except Exception:
        return 4 << 20
    if "v7" in kind:
        return 8 << 20            # 3.2 TB/s HBM: bigger blocks or step cost dominates
    if "v5 lite" in kind or "v5e" in kind:
        return 2 << 20
    return 4 << 20                # v6e / default: streaming roofline plateau


def _pick_c_chunk(C, HW, itemsize, target_bytes):
    """Largest channel chunk (aligned to the packed sublane tile) near target_bytes."""
    align = max(8, 32 // max(1, itemsize))     # 8 for f32, 16 for bf16, 32 for int8/fp8
    rows = max(align, target_bytes // max(1, HW * itemsize))
    if C <= rows:
        return C                               # single full-C chunk (always legal)
    return int(min(C, (rows // align) * align))


def _spatial_attention_impl(inputs, conv1_weight, *, c_chunk=None, target_bytes=None):
    x0 = inputs[0]
    N, C, H, W = x0.shape
    HW = H * W
    flat = [t.reshape(N, C, HW) for t in inputs]             # free reshape on NCHW
    w_flat = conv1_weight.reshape(-1).astype(jnp.float32)    # (18,)
    itemsize = x0.dtype.itemsize

    if target_bytes is None:
        target_bytes = _default_target_bytes()
    if c_chunk is None:
        c_chunk = _pick_c_chunk(C, HW, itemsize, target_bytes)
    c_chunk = int(min(c_chunk, C))
    num_c = pl.cdiv(C, c_chunk)
    needs_mask = (C % c_chunk) != 0
    fused = len(inputs) == 2

    kernel = functools.partial(_sa_kernel, C=C, W=W, masked=needs_mask, fused=fused)

    # VMEM budget: double-buffered input block(s) + output block + (8, HW) f32
    # accumulators + epilogue temporaries + headroom. Never request the whole
    # 64 MiB of a v7x TensorCore.
    block_bytes = c_chunk * HW * itemsize
    vmem_need = (2 * len(inputs) * block_bytes
                 + 2 * HW * itemsize
                 + 2 * 8 * HW * 4
                 + 8 * (HW + 2 * (W + 1)) * 4
                 + (2 << 20))
    vmem_limit = int(min(48 << 20, max(16 << 20, vmem_need + (4 << 20))))

    chunk_spec = pl.BlockSpec((1, c_chunk, HW), lambda n, c: (n, c, 0))
    # TODO(synk): on v7x with N==1 a second "parallel" row-tile grid axis (with a
    # 1-row epilogue halo) would give the second TensorCore work; not done here.
    # TODO(synk): pipeline_mode=pl.Buffered(3) on chunk_spec is worth a sweep on v7x.
    out_flat = pl.pallas_call(
        kernel,
        out_shape=jax.ShapeDtypeStruct((N, 1, HW), x0.dtype),
        grid=(N, num_c),
        in_specs=[pl.BlockSpec(memory_space=pltpu.SMEM)] + [chunk_spec] * len(inputs),
        out_specs=pl.BlockSpec((1, 1, HW), lambda n, c: (n, 0, 0)),
        scratch_shapes=[
            pltpu.VMEM((8, HW), jnp.float32),   # running channel sums (8 partials)
            pltpu.VMEM((8, HW), jnp.float32),   # running channel maxes (8 partials)
        ],
        compiler_params=pltpu.CompilerParams(
            dimension_semantics=("parallel", "arbitrary"),
            vmem_limit_bytes=vmem_limit,
        ),
    )(w_flat, *flat)
    return out_flat.reshape(N, 1, H, W)


def spatial_attention(x, conv1_weight, *, c_chunk=None, target_bytes=None):
    """SpatialAttention: x (N,C,H,W) -> sigmoid(conv3x3([mean_c, max_c])) (N,1,H,W)."""
    return _spatial_attention_impl((x,), conv1_weight, c_chunk=c_chunk,
                                   target_bytes=target_bytes)


def spatial_attention_diff(a, b, conv1_weight, *, c_chunk=None, target_bytes=None):
    """SpatialAttention applied to (a - b), with the subtraction fused into the
    kernel's chunk read (the difference tensor never touches HBM)."""
    return _spatial_attention_impl((a, b), conv1_weight, c_chunk=c_chunk,
                                   target_bytes=target_bytes)


def _sa_reference(x, conv1_weight):
    avg = jnp.mean(x, axis=1, keepdims=True)
    mx = jnp.max(x, axis=1, keepdims=True)
    stacked = jnp.concatenate([avg, mx], axis=1)
    y = lax.conv_general_dilated(
        stacked, conv1_weight, window_strides=(1, 1), padding=((1, 1), (1, 1)),
        dimension_numbers=("NCHW", "OIHW", "NCHW"))
    return jax.nn.sigmoid(y)


# ----------------------------------------------------------------------------
# FFTConvBlock forward (JAX orchestration around the Pallas SpatialAttention)
# ----------------------------------------------------------------------------
def _conv2d(x, w, b=None, stride=1, padding=0):
    # TODO(synk): dense 3x3/1x1/4x4-s2 convolutions ride XLA's conv here; only
    # the SpatialAttention stage (the reviewed kernel) is hand-written in Pallas.
    y = lax.conv_general_dilated(
        x, w, window_strides=(stride, stride),
        padding=((padding, padding), (padding, padding)),
        dimension_numbers=("NCHW", "OIHW", "NCHW"))
    if b is not None:
        y = y + b.reshape(1, -1, 1, 1)
    return y


def _leaky_relu(x, slope):
    return jnp.where(x >= 0, x, slope * x)


def fft_conv_block_forward(params, x, enc=None, dec=None, *, relu_slope=0.2,
                           downsample=True, use_fft_phase=False,
                           use_fft_amp=False, sa_diff_fn=None):
    if sa_diff_fn is None:
        # Fused Pallas path: `out - x_fft_res` is computed inside the SA kernel.
        sa_diff_fn = lambda a, b: spatial_attention_diff(a, b, params["sa_w"])

    out = _leaky_relu(_conv2d(x, params["conv1_w"], params["conv1_b"], padding=1), relu_slope)
    out = _leaky_relu(_conv2d(out, params["conv2_w"], params["conv2_b"], padding=1), relu_slope)

    if use_fft_phase != use_fft_amp:        # exactly one FFT branch (as in torch)
        x_res = _conv2d(x, params["id_w"], params["id_b"])
        # TODO(synk): FFT has no Pallas primitive; fft2/ifft2 stay on XLA.
        xf = jnp.fft.fft2(x_res, axes=(-2, -1))
        amp, phase = jnp.abs(xf), jnp.angle(xf)
        if use_fft_phase:
            phase = _conv2d(phase, params["fft1_w"], params["fft1_b"])
            phase = _leaky_relu(phase, relu_slope)
            phase = _conv2d(phase, params["fft2_w"], params["fft2_b"])
        else:
            amp = _conv2d(amp, params["fft1_w"], params["fft1_b"])
            amp = _leaky_relu(amp, relu_slope)
            amp = _conv2d(amp, params["fft2_w"], params["fft2_b"])
        x_fft_res = jnp.fft.ifft2(amp * jnp.exp(1j * phase), axes=(-2, -1)).real
        difsa = sa_diff_fn(out, x_fft_res)  # fused (out - x_fft_res) SA kernel
        out = out * difsa
        out = out + x_res + x_fft_res
    else:
        out = out + _conv2d(x, params["id_w"], params["id_b"])

    if enc is not None and dec is not None:     # csff path (unused in the demo)
        out = (out + _conv2d(enc, params["csff_enc_w"], params["csff_enc_b"], padding=1)
                   + _conv2d(dec, params["csff_dec_w"], params["csff_dec_b"], padding=1))

    if downsample:
        out_down = _conv2d(out, params["down_w"], None, stride=2, padding=1)
        return out_down, out
    return out


def _init_block_params(key, in_size, out_size):
    ks = jax.random.split(key, 12)

    def kaiming_u(k, shape, fan_in):
        b = 1.0 / (fan_in ** 0.5)
        return jax.random.uniform(k, shape, jnp.float32, minval=-b, maxval=b)

    return {
        "conv1_w": kaiming_u(ks[0], (out_size, in_size, 3, 3), in_size * 9),
        "conv1_b": kaiming_u(ks[1], (out_size,), in_size * 9),
        "conv2_w": kaiming_u(ks[2], (out_size, out_size, 3, 3), out_size * 9),
        "conv2_b": kaiming_u(ks[3], (out_size,), out_size * 9),
        "id_w":    kaiming_u(ks[4], (out_size, in_size, 1, 1), in_size),
        "id_b":    kaiming_u(ks[5], (out_size,), in_size),
        "fft1_w":  kaiming_u(ks[6], (out_size, out_size, 1, 1), out_size),
        "fft1_b":  kaiming_u(ks[7], (out_size,), out_size),
        "fft2_w":  kaiming_u(ks[8], (out_size, out_size, 1, 1), out_size),
        "fft2_b":  kaiming_u(ks[9], (out_size,), out_size),
        "sa_w":    kaiming_u(ks[10], (1, 2, 3, 3), 2 * 9),
        "down_w":  kaiming_u(ks[11], (out_size, out_size, 4, 4), out_size * 16),
    }


# ----------------------------------------------------------------------------
if __name__ == "__main__":
    key = jax.random.PRNGKey(0)
    k_x, k_w, k_x2, k_b2, k_blk, k_xb = jax.random.split(key, 6)

    # --- SpatialAttention kernel: baseline shape ---
    N, C, H, W = 2, 4, 16, 16
    x = jax.random.normal(k_x, (N, C, H, W), dtype=jnp.float32)
    bound = 1.0 / ((2 * KSIZE * KSIZE) ** 0.5)
    sa_w = jax.random.uniform(k_w, (1, 2, KSIZE, KSIZE), jnp.float32,
                              minval=-bound, maxval=bound)

    out = jax.block_until_ready(spatial_attention(x, sa_w))
    ref = _sa_reference(x, sa_w)
    assert out.shape == (N, 1, H, W)
    assert jnp.allclose(out, ref, atol=1e-5, rtol=1e-5)

    # --- multi-chunk + ragged-tail channel reduction (C=20, chunk=8) ---
    x2 = jax.random.normal(k_x2, (N, 20, H, W), dtype=jnp.float32)
    out2 = jax.block_until_ready(spatial_attention(x2, sa_w, c_chunk=8))
    ref2 = _sa_reference(x2, sa_w)
    assert jnp.allclose(out2, ref2, atol=1e-5, rtol=1e-5)

    # --- fused (a - b) producer path ---
    b2 = jax.random.normal(k_b2, (N, 20, H, W), dtype=jnp.float32)
    outd = jax.block_until_ready(spatial_attention_diff(x2, b2, sa_w, c_chunk=8))
    refd = _sa_reference(x2 - b2, sa_w)
    assert jnp.allclose(outd, refd, atol=1e-5, rtol=1e-5)

    # --- bf16 input stays bf16 in the HBM/VMEM stream; f32 accumulation inside ---
    out_bf = jax.block_until_ready(spatial_attention(x.astype(jnp.bfloat16), sa_w))
    assert out_bf.dtype == jnp.bfloat16
    assert jnp.allclose(out_bf.astype(jnp.float32), ref, atol=2e-2, rtol=2e-2)

    # --- Full FFTConvBlock forward (FFT-AMP branch + downsample) ---
    params = _init_block_params(k_blk, in_size=4, out_size=8)
    xb = jax.random.normal(k_xb, (2, 4, 16, 16), dtype=jnp.float32)
    out_down, out_full = fft_conv_block_forward(
        params, xb, relu_slope=0.2, downsample=True, use_fft_amp=True)
    jax.block_until_ready((out_down, out_full))
    assert out_down.shape == (2, 8, 8, 8) and out_full.shape == (2, 8, 16, 16)

    ref_down, ref_full = fft_conv_block_forward(
        params, xb, relu_slope=0.2, downsample=True, use_fft_amp=True,
        sa_diff_fn=lambda a, b: _sa_reference(a - b, params["sa_w"]))
    assert jnp.allclose(out_full, ref_full, atol=1e-3, rtol=1e-3)
    assert jnp.allclose(out_down, ref_down, atol=1e-3, rtol=1e-3)

    print("KERNEL_OK")
</pallas_src>

<mosaic_0001>
module attributes {stable_mosaic.version = 11 : i64} {
  func.func @_sa_kernel(%arg0: i32, %arg1: i32, %arg2: memref<18xf32, #tpu.memory_space<smem>>, %arg3: memref<1x4x256xf32, #tpu.memory_space<vmem>>, %arg4: memref<1x1x256xf32, #tpu.memory_space<vmem>>, %arg5: memref<8x256xf32, #tpu.memory_space<vmem>>, %arg6: memref<8x256xf32, #tpu.memory_space<vmem>>) attributes {dimension_semantics = [#tpu.dimension_semantics<parallel>, #tpu.dimension_semantics<arbitrary>], iteration_bounds = array<i64: 2, 1>, scalar_prefetch = 0 : i64, scratch_operands = 2 : i64, tpu.core_type = #tpu.core_type<tc>, window_params = [{transform_indices = @transform_0, window_bounds = array<i64: 18>}, {transform_indices = @transform_1, window_bounds = array<i64: 1, 4, 256>}, {transform_indices = @transform_2, window_bounds = array<i64: 1, 1, 256>}]} {
    %c0_i32 = arith.constant 0 : i32
    %0 = arith.cmpi eq, %arg1, %c0_i32 : i32
    %1 = arith.extui %0 : i1 to i32
    %c0_i32_0 = arith.constant 0 : i32
    %2 = arith.cmpi ne, %1, %c0_i32_0 : i32
    scf.if %2 {
      %cst_14 = arith.constant 0.000000e+00 : f32
      %18 = vector.broadcast %cst_14 : f32 to vector<8x256xf32>
      %c0_15 = arith.constant 0 : index
      %c0_16 = arith.constant 0 : index
      %19 = vector.load %arg5[%c0_15, %c0_16] : memref<8x256xf32, #tpu.memory_space<vmem>>, vector<8x256xf32>
      tpu.vector_store %arg5[%c0_15, %c0_16], %18 {strides = array<i32>} : memref<8x256xf32, #tpu.memory_space<vmem>>, vector<8x256xf32>,
      %cst_17 = arith.constant 0xFF800000 : f32
      %20 = vector.broadcast %cst_17 : f32 to vector<8x256xf32>
      %c0_18 = arith.constant 0 : index
      %c0_19 = arith.constant 0 : index
      %21 = vector.load %arg6[%c0_18, %c0_19] : memref<8x256xf32, #tpu.memory_space<vmem>>, vector<8x256xf32>
      tpu.vector_store %arg6[%c0_18, %c0_19], %20 {strides = array<i32>} : memref<8x256xf32, #tpu.memory_space<vmem>>, vector<8x256xf32>,
    } else {
    }
    %c0 = arith.constant 0 : index
    %c0_1 = arith.constant 0 : index
    %c0_2 = arith.constant 0 : index
    %3 = vector.load %arg3[%c0, %c0_1, %c0_2] : memref<1x4x256xf32, #tpu.memory_space<vmem>>, vector<1x4x256xf32>
    %4 = vector.shape_cast %3 : vector<1x4x256xf32> to vector<4x256xf32>
    %cst = arith.constant dense<0.000000e+00> : vector<256xf32>
    %5 = vector.multi_reduction <add>, %4, %cst [0] : vector<4x256xf32> to vector<256xf32>
    %6 = vector.shape_cast %5 : vector<256xf32> to vector<1x256xf32>
    %cst_3 = arith.constant dense<0xFF800000> : vector<256xf32>
    %7 = vector.multi_reduction <maximumf>, %4, %cst_3 [0] : vector<4x256xf32> to vector<256xf32>
    %8 = vector.shape_cast %7 : vector<256xf32> to vector<1x256xf32>
    %c0_4 = arith.constant 0 : index
    %c0_5 = arith.constant 0 : index
    %9 = vector.load %arg5[%c0_4, %c0_5] : memref<8x256xf32, #tpu.memory_space<vmem>>, vector<1x256xf32>
    %10 = arith.addf %9, %6 : vector<1x256xf32>
    %c0_6 = arith.constant 0 : index
    %c0_7 = arith.constant 0 : index
    %11 = vector.load %arg5[%c0_6, %c0_7] : memref<8x256xf32, #tpu.memory_space<vmem>>, vector<1x256xf32>
    tpu.vector_store %arg5[%c0_6, %c0_7], %10 {strides = array<i32>} : memref<8x256xf32, #tpu.memory_space<vmem>>, vector<1x256xf32>,
    %c0_8 = arith.constant 0 : index
    %c0_9 = arith.constant 0 : index
    %12 = vector.load %arg6[%c0_8, %c0_9] : memref<8x256xf32, #tpu.memory_space<vmem>>, vector<1x256xf32>
    %13 = arith.maximumf %12, %8 : vector<1x256xf32>
    %c0_10 = arith.constant 0 : index
    %c0_11 = arith.constant 0 : index
    %14 = vector.load %arg6[%c0_10, %c0_11] : memref<8x256xf32, #tpu.memory_space<vmem>>, vector<1x256xf32>
    tpu.vector_store %arg6[%c0_10, %c0_11], %13 {strides = array<i32>} : memref<8x256xf32, #tpu.memory_space<vmem>>, vector<1x256xf32>,
    %c0_i32_12 = arith.constant 0 : i32
    %15 = arith.cmpi eq, %arg1, %c0_i32_12 : i32
    %16 = arith.extui %15 : i1 to i32
    %c0_i32_13 = arith.constant 0 : i32
    %17 = arith.cmpi ne, %16, %c0_i32_13 : i32
    scf.if %17 {
      %c0_14 = arith.constant 0 : index
      %c0_15 = arith.constant 0 : index
      %18 = vector.load %arg5[%c0_14, %c0_15] : memref<8x256xf32, #tpu.memory_space<vmem>>, vector<8x256xf32>
      %cst_16 = arith.constant dense<0.000000e+00> : vector<256xf32>
      %19 = vector.multi_reduction <add>, %18, %cst_16 [0] : vector<8x256xf32> to vector<256xf32>
      %20 = vector.shape_cast %19 : vector<256xf32> to vector<1x256xf32>
      %cst_17 = arith.constant 2.500000e-01 : f32
      %21 = vector.broadcast %cst_17 : f32 to vector<1x256xf32>
      %22 = arith.mulf %20, %21 : vector<1x256xf32>
      %c0_18 = arith.constant 0 : index
      %c0_19 = arith.constant 0 : index
      %23 = vector.load %arg6[%c0_18, %c0_19] : memref<8x256xf32, #tpu.memory_space<vmem>>, vector<8x256xf32>
      %cst_20 = arith.constant dense<0xFF800000> : vector<256xf32>
      %24 = vector.multi_reduction <maximumf>, %23, %cst_20 [0] : vector<8x256xf32> to vector<256xf32>
      %25 = vector.shape_cast %24 : vector<256xf32> to vector<1x256xf32>
      %c0_i32_21 = arith.constant 0 : i32
      %26 = arith.sitofp %c0_i32_21 : i32 to f32
      %27 = vector.broadcast %26 : f32 to vector<1x17xf32>
      %28 = tpu.concatenate %27, %22 in 1 : vector<1x17xf32>, vector<1x256xf32> -> vector<1x273xf32>
      %29 = vector.broadcast %26 : f32 to vector<1x17xf32>
      %30 = tpu.concatenate %28, %29 in 1 : vector<1x273xf32>, vector<1x17xf32> -> vector<1x290xf32>
      %c0_i32_22 = arith.constant 0 : i32
      %31 = arith.sitofp %c0_i32_22 : i32 to f32
      %32 = vector.broadcast %31 : f32 to vector<1x17xf32>
      %33 = tpu.concatenate %32, %25 in 1 : vector<1x17xf32>, vector<1x256xf32> -> vector<1x273xf32>
      %34 = vector.broadcast %31 : f32 to vector<1x17xf32>
      %35 = tpu.concatenate %33, %34 in 1 : vector<1x273xf32>, vector<1x17xf32> -> vector<1x290xf32>
      %36 = tpu.iota {dimensions = array<i32: 1>} : vector<1x256xi32>
      %c16_i32 = arith.constant 16 : i32
      %c0_i32_23 = arith.constant 0 : i32
      %37 = arith.cmpi eq, %c16_i32, %c0_i32_23 : i32
      %c1_i32 = arith.constant 1 : i32
      %38 = arith.select %37, %c1_i32, %c16_i32 : i32
      %39 = vector.broadcast %38 : i32 to vector<1x256xi32>
      %40 = arith.remsi %36, %39 : vector<1x256xi32>
      %c0_i32_24 = arith.constant 0 : i32
      %41 = vector.broadcast %c0_i32_24 : i32 to vector<1x256xi32>
      %42 = arith.cmpi ne, %40, %41 : vector<1x256xi32>
      %c0_i32_25 = arith.constant 0 : i32
      %43 = vector.broadcast %c0_i32_25 : i32 to vector<1x256xi32>
      %44 = arith.cmpi slt, %40, %43 : vector<1x256xi32>
      %c0_i32_26 = arith.constant 0 : i32
      %45 = arith.cmpi slt, %38, %c0_i32_26 : i32
      %46 = vector.broadcast %45 : i1 to vector<1x256xi1>
      %47 = vector.broadcast %46 : vector<1x256xi1> to vector<1x256xi1>
      %48 = arith.xori %44, %47 : vector<1x256xi1>
      %49 = arith.andi %48, %42 : vector<1x256xi1>
      %50 = vector.broadcast %38 : i32 to vector<1x256xi32>
      %51 = arith.addi %40, %50 : vector<1x256xi32>
      %52 = arith.select %49, %51, %40 : vector<1x256xi1>, vector<1x256xi32>
      %c1_i32_27 = arith.constant 1 : i32
      %53 = vector.broadcast %c1_i32_27 : i32 to vector<1x256xi32>
      %54 = arith.cmpi sge, %52, %53 : vector<1x256xi32>
      %c14_i32 = arith.constant 14 : i32
      %55 = vector.broadcast %c14_i32 : i32 to vector<1x256xi32>
      %56 = arith.cmpi sle, %52, %55 : vector<1x256xi32>
      %c0_28 = arith.constant 0 : index
      %57 = memref.load %arg2[%c0_28] : memref<18xf32, #tpu.memory_space<smem>>
      %c1 = arith.constant 1 : index
      %58 = memref.load %arg2[%c1] : memref<18xf32, #tpu.memory_space<smem>>
      %c2 = arith.constant 2 : index
      %59 = memref.load %arg2[%c2] : memref<18xf32, #tpu.memory_space<smem>>
      %c3 = arith.constant 3 : index
      %60 = memref.load %arg2[%c3] : memref<18xf32, #tpu.memory_space<smem>>
      %c4 = arith.constant 4 : index
      %61 = memref.load %arg2[%c4] : memref<18xf32, #tpu.memory_space<smem>>
      %c5 = arith.constant 5 : index
      %62 = memref.load %arg2[%c5] : memref<18xf32, #tpu.memory_space<smem>>
      %c6 = arith.constant 6 : index
      %63 = memref.load %arg2[%c6] : memref<18xf32, #tpu.memory_space<smem>>
      %c7 = arith.constant 7 : index
      %64 = memref.load %arg2[%c7] : memref<18xf32, #tpu.memory_space<smem>>
      %c8 = arith.constant 8 : index
      %65 = memref.load %arg2[%c8] : memref<18xf32, #tpu.memory_space<smem>>
      %c9 = arith.constant 9 : index
      %66 = memref.load %arg2[%c9] : memref<18xf32, #tpu.memory_space<smem>>
      %c10 = arith.constant 10 : index
      %67 = memref.load %arg2[%c10] : memref<18xf32, #tpu.memory_space<smem>>
      %c11 = arith.constant 11 : index
      %68 = memref.load %arg2[%c11] : memref<18xf32, #tpu.memory_space<smem>>
      %c12 = arith.constant 12 : index
      %69 = memref.load %arg2[%c12] : memref<18xf32, #tpu.memory_space<smem>>
      %c13 = arith.constant 13 : index
      %70 = memref.load %arg2[%c13] : memref<18xf32, #tpu.memory_space<smem>>
      %c14 = arith.constant 14 : index
      %71 = memref.load %arg2[%c14] : memref<18xf32, #tpu.memory_space<smem>>
      %c15 = arith.constant 15 : index
      %72 = memref.load %arg2[%c15] : memref<18xf32, #tpu.memory_space<smem>>
      %c16 = arith.constant 16 : index
      %73 = memref.load %arg2[%c16] : memref<18xf32, #tpu.memory_space<smem>>
      %c17 = arith.constant 17 : index
      %74 = memref.load %arg2[%c17] : memref<18xf32, #tpu.memory_space<smem>>
      %cst_29 = arith.constant 0.000000e+00 : f32
      %75 = vector.broadcast %cst_29 : f32 to vector<1x256xf32>
      %76 = vector.extract_strided_slice %30 {offsets = [0, 0], sizes = [1, 256], strides = [1, 1]} : vector<1x290xf32> to vector<1x256xf32>
      %77 = vector.extract_strided_slice %35 {offsets = [0, 0], sizes = [1, 256], strides = [1, 1]} : vector<1x290xf32> to vector<1x256xf32>
      %78 = vector.broadcast %57 : f32 to vector<1x256xf32>
      %79 = arith.mulf %78, %76 : vector<1x256xf32>
      %80 = vector.broadcast %66 : f32 to vector<1x256xf32>
      %81 = arith.mulf %80, %77 : vector<1x256xf32>
      %82 = arith.addf %79, %81 : vector<1x256xf32>
      %cst_30 = arith.constant 0.000000e+00 : f32
      %83 = vector.broadcast %cst_30 : f32 to vector<1x256xf32>
      %84 = arith.select %54, %82, %83 : vector<1x256xi1>, vector<1x256xf32>
      %85 = arith.addf %75, %84 : vector<1x256xf32>
      %86 = vector.extract_strided_slice %30 {offsets = [0, 1], sizes = [1, 256], strides = [1, 1]} : vector<1x290xf32> to vector<1x256xf32>
      %87 = vector.extract_strided_slice %35 {offsets = [0, 1], sizes = [1, 256], strides = [1, 1]} : vector<1x290xf32> to vector<1x256xf32>
      %88 = vector.broadcast %58 : f32 to vector<1x256xf32>
      %89 = arith.mulf %88, %86 : vector<1x256xf32>
      %90 = vector.broadcast %67 : f32 to vector<1x256xf32>
      %91 = arith.mulf %90, %87 : vector<1x256xf32>
      %92 = arith.addf %89, %91 : vector<1x256xf32>
      %93 = arith.addf %85, %92 : vector<1x256xf32>
      %94 = vector.extract_strided_slice %30 {offsets = [0, 2], sizes = [1, 256], strides = [1, 1]} : vector<1x290xf32> to vector<1x256xf32>
      %95 = vector.extract_strided_slice %35 {offsets = [0, 2], sizes = [1, 256], strides = [1, 1]} : vector<1x290xf32> to vector<1x256xf32>
      %96 = vector.broadcast %59 : f32 to vector<1x256xf32>
      %97 = arith.mulf %96, %94 : vector<1x256xf32>
      %98 = vector.broadcast %68 : f32 to vector<1x256xf32>
      %99 = arith.mulf %98, %95 : vector<1x256xf32>
      %100 = arith.addf %97, %99 : vector<1x256xf32>
      %cst_31 = arith.constant 0.000000e+00 : f32
      %101 = vector.broadcast %cst_31 : f32 to vector<1x256xf32>
      %102 = arith.select %56, %100, %101 : vector<1x256xi1>, vector<1x256xf32>
      %103 = arith.addf %93, %102 : vector<1x256xf32>
      %104 = vector.extract_strided_slice %30 {offsets = [0, 16], sizes = [1, 256], strides = [1, 1]} : vector<1x290xf32> to vector<1x256xf32>
      %105 = vector.extract_strided_slice %35 {offsets = [0, 16], sizes = [1, 256], strides = [1, 1]} : vector<1x290xf32> to vector<1x256xf32>
      %106 = vector.broadcast %60 : f32 to vector<1x256xf32>
      %107 = arith.mulf %106, %104 : vector<1x256xf32>
      %108 = vector.broadcast %69 : f32 to vector<1x256xf32>
      %109 = arith.mulf %108, %105 : vector<1x256xf32>
      %110 = arith.addf %107, %109 : vector<1x256xf32>
      %cst_32 = arith.constant 0.000000e+00 : f32
      %111 = vector.broadcast %cst_32 : f32 to vector<1x256xf32>
      %112 = arith.select %54, %110, %111 : vector<1x256xi1>, vector<1x256xf32>
      %113 = arith.addf %103, %112 : vector<1x256xf32>
      %114 = vector.extract_strided_slice %30 {offsets = [0, 17], sizes = [1, 256], strides = [1, 1]} : vector<1x290xf32> to vector<1x256xf32>
      %115 = vector.extract_strided_slice %35 {offsets = [0, 17], sizes = [1, 256], strides = [1, 1]} : vector<1x290xf32> to vector<1x256xf32>
      %116 = vector.broadcast %61 : f32 to vector<1x256xf32>
      %117 = arith.mulf %116, %114 : vector<1x256xf32>
      %118 = vector.broadcast %70 : f32 to vector<1x256xf32>
      %119 = arith.mulf %118, %115 : vector<1x256xf32>
      %120 = arith.addf %117, %119 : vector<1x256xf32>
      %121 = arith.addf %113, %120 : vector<1x256xf32>
      %122 = vector.extract_strided_slice %30 {offsets = [0, 18], sizes = [1, 256], strides = [1, 1]} : vector<1x290xf32> to vector<1x256xf32>
      %123 = vector.extract_strided_slice %35 {offsets = [0, 18], sizes = [1, 256], strides = [1, 1]} : vector<1x290xf32> to vector<1x256xf32>
      %124 = vector.broadcast %62 : f32 to vector<1x256xf32>
      %125 = arith.mulf %124, %122 : vector<1x256xf32>
      %126 = vector.broadcast %71 : f32 to vector<1x256xf32>
      %127 = arith.mulf %126, %123 : vector<1x256xf32>
      %128 = arith.addf %125, %127 : vector<1x256xf32>
      %cst_33 = arith.constant 0.000000e+00 : f32
      %129 = vector.broadcast %cst_33 : f32 to vector<1x256xf32>
      %130 = arith.select %56, %128, %129 : vector<1x256xi1>, vector<1x256xf32>
      %131 = arith.addf %121, %130 : vector<1x256xf32>
      %132 = vector.extract_strided_slice %30 {offsets = [0, 32], sizes = [1, 256], strides = [1, 1]} : vector<1x290xf32> to vector<1x256xf32>
      %133 = vector.extract_strided_slice %35 {offsets = [0, 32], sizes = [1, 256], strides = [1, 1]} : vector<1x290xf32> to vector<1x256xf32>
      %134 = vector.broadcast %63 : f32 to vector<1x256xf32>
      %135 = arith.mulf %134, %132 : vector<1x256xf32>
      %136 = vector.broadcast %72 : f32 to vector<1x256xf32>
      %137 = arith.mulf %136, %133 : vector<1x256xf32>
      %138 = arith.addf %135, %137 : vector<1x256xf32>
      %cst_34 = arith.constant 0.000000e+00 : f32
      %139 = vector.broadcast %cst_34 : f32 to vector<1x256xf32>
      %140 = arith.select %54, %138, %139 : vector<1x256xi1>, vector<1x256xf32>
      %141 = arith.addf %131, %140 : vector<1x256xf32>
      %142 = vector.extract_strided_slice %30 {offsets = [0, 33], sizes = [1, 256], strides = [1, 1]} : vector<1x290xf32> to vector<1x256xf32>
      %143 = vector.extract_strided_slice %35 {offsets = [0, 33], sizes = [1, 256], strides = [1, 1]} : vector<1x290xf32> to vector<1x256xf32>
      %144 = vector.broadcast %64 : f32 to vector<1x256xf32>
      %145 = arith.mulf %144, %142 : vector<1x256xf32>
      %146 = vector.broadcast %73 : f32 to vector<1x256xf32>
      %147 = arith.mulf %146, %143 : vector<1x256xf32>
      %148 = arith.addf %145, %147 : vector<1x256xf32>
      %149 = arith.addf %141, %148 : vector<1x256xf32>
      %150 = vector.extract_strided_slice %30 {offsets = [0, 34], sizes = [1, 256], strides = [1, 1]} : vector<1x290xf32> to vector<1x256xf32>
      %151 = vector.extract_strided_slice %35 {offsets = [0, 34], sizes = [1, 256], strides = [1, 1]} : vector<1x290xf32> to vector<1x256xf32>
      %152 = vector.broadcast %65 : f32 to vector<1x256xf32>
      %153 = arith.mulf %152, %150 : vector<1x256xf32>
      %154 = vector.broadcast %74 : f32 to vector<1x256xf32>
      %155 = arith.mulf %154, %151 : vector<1x256xf32>
      %156 = arith.addf %153, %155 : vector<1x256xf32>
      %cst_35 = arith.constant 0.000000e+00 : f32
      %157 = vector.broadcast %cst_35 : f32 to vector<1x256xf32>
      %158 = arith.select %56, %156, %157 : vector<1x256xi1>, vector<1x256xf32>
      %159 = arith.addf %149, %158 : vector<1x256xf32>
      %160 = arith.negf %159 : vector<1x256xf32>
      %161 = math.exp %160 : vector<1x256xf32>
      %cst_36 = arith.constant 1.000000e+00 : f32
      %162 = vector.broadcast %cst_36 : f32 to vector<1x256xf32>
      %163 = arith.addf %162, %161 : vector<1x256xf32>
      %164 = arith.divf %162, %163 : vector<1x256xf32>
      %c0_37 = arith.constant 0 : index
      %c0_38 = arith.constant 0 : index
      %c0_39 = arith.constant 0 : index
      %165 = vector.load %arg4[%c0_37, %c0_38, %c0_39] : memref<1x1x256xf32, #tpu.memory_space<vmem>>, vector<1x1x256xf32>
      %166 = vector.shape_cast %165 : vector<1x1x256xf32> to vector<1x256xf32>
      %167 = vector.shape_cast %164 : vector<1x256xf32> to vector<1x1x256xf32>
      tpu.vector_store %arg4[%c0_37, %c0_38, %c0_39], %167 {strides = array<i32>} : memref<1x1x256xf32, #tpu.memory_space<vmem>>, vector<1x1x256xf32>,
    } else {
    }
    return
  }
  func.func @transform_0(%arg0: i32, %arg1: i32) -> i32 {
    %c0_i32 = arith.constant 0 : i32
    %c0_i32_0 = arith.constant 0 : i32
    return %c0_i32 : i32
  }
  func.func @transform_1(%arg0: i32, %arg1: i32) -> (i32, i32, i32) {
    %c0_i32 = arith.constant 0 : i32
    %c0_i32_0 = arith.constant 0 : i32
    return %arg0, %arg1, %c0_i32 : i32, i32, i32
  }
  func.func @transform_2(%arg0: i32, %arg1: i32) -> (i32, i32, i32) {
    %c0_i32 = arith.constant 0 : i32
    %c0_i32_0 = arith.constant 0 : i32
    %c0_i32_1 = arith.constant 0 : i32
    return %arg0, %c0_i32, %c0_i32_0 : i32, i32, i32
  }
}

</mosaic_0001>

<llo_original>
// kernel: tpu_custom_call.1
$region0: #{tpu_custom_call.1}
  #allocation0 [shape = 'u32[]', space=smem, size = 0x4, offset = 0x4, fixed_abs, tag = 'smem constant byte address 0x4 - core index']
  #allocation1 [shape = 'u32[144,128]{1,0:T(1,128)}', space=vmem, size = 0x12000, scoped, tag = 'internal scratch']
  #allocation2 [shape = 'f32[8,256]{1,0:T(8,128)}', space=vmem, size = 0x2000, scoped, tag = 'scratch operand']
  #allocation3 [shape = 'f32[8,256]{1,0:T(8,128)}', space=vmem, size = 0x2000, scoped, tag = 'scratch operand']
  %s0 = inlined_call_operand.hbm [shape: f32[18], index: 0, kind: input, shape index: {}]
  %s1 = inlined_call_operand.hbm [shape: f32[2,4,256], index: 1, kind: input, shape index: {}]
  %s2 = inlined_call_operand.hbm [shape: f32[2,1,256], index: 2, kind: output, shape index: {}]
  %s3 = sld [smem:[#allocation0]]
  $region57: #{tpu_custom_call.1} parent=0
    _
  %s5 = ssub.s32 1, %s3
  %s6 = scalar_select 0, %s5, %s3
  $region1: #{tpu_custom_call.1} parent=0
    #allocation4 [shape = 'u8[512]{0}', space=smem, size = 0x200, scoped, tag = 'input window, operand 0, single buffered']
    #allocation5 [shape = 's32[2]{0}', space=sflag, size = 0x8, scoped, tag = 'scoped memory for tpu_custom_call.1']
    #allocation6 [shape = 's32[2]{0}', space=sflag, size = 0x8, scoped, tag = 'scoped memory for tpu_custom_call.1']
    #allocation7 [shape = 's32[2]{0}', space=sflag, size = 0x8, scoped, tag = 'scoped memory for tpu_custom_call.1']
    #allocation8 [shape = 'u8[8192]{0}', space=vmem, size = 0x2000, scoped, tag = 'input window, operand 1']
    #allocation9 [shape = 'u8[2048]{0}', space=vmem, size = 0x800, scoped, tag = 'output window, operand 0']
    %7 = vsyncpa [#allocation7], 0
    %8 = vsyncpa [#allocation5], 0
    %s9 = scalar_lea.sflag [#allocation5], 1
    %10 = vsyncpa %s9, 0
    %11 = vsyncpa [#allocation6], 0
    %s12 = scalar_lea.sflag [#allocation6], 1
    %13 = vsyncpa %s12, 0
    loop: start=0, step=1, limit=4
    $region2: #{tpu_custom_call.1} parent=1 // loop_pre_header
      _
    $region3: #{tpu_custom_call.1} parent=1 // loop_header
      %s15 = sphi 0, %s19
      %p16 = scmp.ge.s32.totalorder %s15, 4
      %s22 = sphi 0, %s34
      %s23 = sphi 0, %s30
      %s24 = sphi 0, %s22
      %s25 = sphi 0, %s23
      %s26 = sphi 0, %s24
      %s27 = sphi 0, %s25
      %s35 = sphi 0, %s35
      %s37 = sphi 0, %s35
      %s38 = sphi 0, %s37
      %s52 = sphi 0, %s38
      %s60 = sphi 0, %s62
      %s63 = sphi 0, %s60
      %s64 = sphi 0, %s63
      %s80 = sphi 0, %s64
      %s86 = sphi 0, %s88
      %s89 = sphi 0, %s86
      %s90 = sphi 0, %s89
      %s106 = sphi 0, %s90
    $region4: #{tpu_custom_call.1} parent=1 // loop_header_branch
      %18 = sbr.rel (%p16) target = $region8
    $region5: #{tpu_custom_call.1} parent=1 // loop_body
      %s20 = ssub.s32 %s15, 1
      %s21 = ssub.s32 %s15, 2
      %s28 = sadd.s32 1, %s23
      %p29 = scmp.ge.s32.totalorder %s28, 1
      %s30 = scalar_select %p29, 0, %s28
      %s31 = sadd.s32 1, %s22
      %s32 = scalar_select %p29, %s31, %s22
      %p33 = scmp.ge.s32.totalorder %s32, 2
      %s34 = scalar_select %p33, 0, %s32
      %s36 = sadd.s32 %s35, 1
      %p39 = scmp.eq.s32.totalorder %s15, 1
      %p40 = scmp.ne.s32.totalorder %s35, %s37
      %p41 = scmp.eq.s32.totalorder %s15, 0
      %p42 = por %p40, %p41
      %p43 = scmp.ne.s32.totalorder %s35, %s37
      %p44 = scmp.eq.s32.totalorder %s20, 1
      %p45 = por %p43, %p44
      %p46 = scmp.ne.s32.totalorder %s37, %s38
      %p47 = scmp.eq.s32.totalorder %s20, 0
      %p48 = por %p46, %p47
      %p49 = scmp.ne.s32.totalorder %s37, %s38
      %p50 = scmp.eq.s32.totalorder %s21, 1
      %p51 = por %p49, %p50
      %p53 = scmp.ne.s32.totalorder %s38, %s52
      %p54 = scmp.eq.s32.totalorder %s21, 0
      %p55 = por %p53, %p54
      %s56 = ssub.s32 %s22, %s34
      %s57 = ssub.s32 %s23, %s30
      %s58 = sor.u32 %s56, %s57
      %p59 = scmp.eq.s32.totalorder %s58, 0
      %s61 = sadd.s32 %s60, 1
      %s62 = scalar_select %p59, %s60, %s61
      %p65 = pneg %p59
      %p66 = scmp.eq.s32.totalorder %s15, 1
      %p67 = por %p65, %p66
      %p68 = scmp.ne.s32.totalorder %s60, %s63
      %p69 = scmp.eq.s32.totalorder %s15, 0
      %p70 = por %p68, %p69
      %p71 = scmp.ne.s32.totalorder %s60, %s63
      %p72 = scmp.eq.s32.totalorder %s20, 1
      %p73 = por %p71, %p72
      %p74 = scmp.ne.s32.totalorder %s63, %s64
      %p75 = scmp.eq.s32.totalorder %s20, 0
      %p76 = por %p74, %p75
      %p77 = scmp.ne.s32.totalorder %s63, %s64
      %p78 = scmp.eq.s32.totalorder %s21, 1
      %p79 = por %p77, %p78
      %p81 = scmp.ne.s32.totalorder %s64, %s80
      %p82 = scmp.eq.s32.totalorder %s21, 0
      %p83 = por %p81, %p82
      %s84 = ssub.s32 %s22, %s34
      %p85 = scmp.eq.s32.totalorder %s84, 0
      %s87 = sadd.s32 %s86, 1
      %s88 = scalar_select %p85, %s86, %s87
      %p91 = pneg %p85
      %p92 = scmp.eq.s32.totalorder %s15, 1
      %p93 = por %p91, %p92
      %p94 = scmp.ne.s32.totalorder %s86, %s89
      %p95 = scmp.eq.s32.totalorder %s15, 0
      %p96 = por %p94, %p95
      %p97 = scmp.ne.s32.totalorder %s86, %s89
      %p98 = scmp.eq.s32.totalorder %s20, 1
      %p99 = por %p97, %p98
      %p100 = scmp.ne.s32.totalorder %s89, %s90
      %p101 = scmp.eq.s32.totalorder %s20, 0
      %p102 = por %p100, %p101
      %p103 = scmp.ne.s32.totalorder %s89, %s90
      %p104 = scmp.eq.s32.totalorder %s21, 1
      %p105 = por %p103, %p104
      %p107 = scmp.ne.s32.totalorder %s90, %s106
      %p108 = scmp.eq.s32.totalorder %s21, 0
      %p109 = por %p107, %p108
      %p110 = scmp.le.s32.totalorder 1, %s15
      %p111 = scmp.lt.s32.totalorder %s15, 3
      %p112 = pnand %p110, %p111
      %p113 = pneg %p112
      // Predicated region
      $region9: #{tpu_custom_call.1} parent=5 // pred_check
        _
      $region10: #{tpu_custom_call.1} parent=5 // pred_check_branch
        %115 = sbr.rel (%p112) target = $region12
      $region11: #{tpu_custom_call.1} parent=5 // pred_region
        %s116 = ssub.s32 %s15, 1
        // Predicated region
        $region13: #{tpu_custom_call.1} parent=11 // pred_check
          %p117 = pneg %p48
        $region14: #{tpu_custom_call.1} parent=11 // pred_check_branch
          %119 = sbr.rel (%p117) target = $region16
        $region15: #{tpu_custom_call.1} parent=11 // pred_region
          %s121 = ssub.s32 16, 16
          %122 = vsyncadd [#allocation7], %s121
          %125 = dma.hbm_to_smem %s0, 16, [#allocation4], [#allocation7]
        $region16: #{tpu_custom_call.1} parent=11 // pred_fallthru
          _
      $region12: #{tpu_custom_call.1} parent=5 // pred_fallthru
        _
      %p126 = scmp.lt.s32.totalorder %s15, 2
      // Predicated region
      $region17: #{tpu_custom_call.1} parent=5 // pred_check
        %p127 = pneg %p126
      $region18: #{tpu_custom_call.1} parent=5 // pred_check_branch
        %129 = sbr.rel (%p127) target = $region20
      $region19: #{tpu_custom_call.1} parent=5 // pred_region
        // Predicated region
        $region21: #{tpu_custom_call.1} parent=19 // pred_check
          %p130 = pneg %p70
        $region22: #{tpu_custom_call.1} parent=19 // pred_check_branch
          %132 = sbr.rel (%p130) target = $region24
        $region23: #{tpu_custom_call.1} parent=19 // pred_region
          %s133 = sand.u32 %s60, 1
          %s134 = scalar_lea.sflag [#allocation5], %s133
          %s135 = sand.u32 %s60, 1
          %s136 = smul.addr %s135, 8
          %s137 = scalar_lea.vmem [#allocation8], %s136
          %s139 = ssub.s32 128, 128
          %140 = vsyncadd %s134, %s139
          %s141 = smul.addr %s23, 2
          %s142 = smul.addr %s22, 2
          %s143 = sadd.s32 %s141, %s142
          %s144 = smul.addr %s143, 64
          %s145 = scalar_lea.hbm %s1, %s144
          %s147 = sshll.u32 %s137, 4
          %s148 = int_to_ptr.vmem [resolvable:$true] %s147
          %150 = dma.hbm_to_vmem [thread:$0]  %s145, 128, %s148, %s134
        $region24: #{tpu_custom_call.1} parent=19 // pred_fallthru
          _
      $region20: #{tpu_custom_call.1} parent=5 // pred_fallthru
        _
      %p151 = scmp.le.s32.totalorder 1, %s15
      %p152 = scmp.lt.s32.totalorder %s15, 3
      %p153 = pnand %p151, %p152
      %p154 = pneg %p153
      // Predicated region
      $region25: #{tpu_custom_call.1} parent=5 // pred_check
        _
      $region26: #{tpu_custom_call.1} parent=5 // pred_check_branch
        %156 = sbr.rel (%p153) target = $region28
      $region27: #{tpu_custom_call.1} parent=5 // pred_region
        %s157 = ssub.s32 %s15, 1
        // Predicated region
        $region29: #{tpu_custom_call.1} parent=27 // pred_check
          %p158 = pneg %p48
        $region30: #{tpu_custom_call.1} parent=27 // pred_check_branch
          %160 = sbr.rel (%p158) target = $region32
        $region31: #{tpu_custom_call.1} parent=27 // pred_region
          %161 = dma.done [#allocation7], 16
        $region32: #{tpu_custom_call.1} parent=27 // pred_fallthru
          _
        %s162 = sand.u32 %s63, 1
        %s163 = scalar_lea.sflag [#allocation5], %s162
        %s164 = sand.u32 %s63, 1
        %s165 = smul.addr %s164, 8
        %s166 = scalar_lea.vmem [#allocation8], %s165
        // Predicated region
        $region33: #{tpu_custom_call.1} parent=27 // pred_check
          %p167 = pneg %p76
        $region34: #{tpu_custom_call.1} parent=27 // pred_check_branch
          %169 = sbr.rel (%p167) target = $region36
        $region35: #{tpu_custom_call.1} parent=27 // pred_region
          %170 = dma.done %s163, 128
        $region36: #{tpu_custom_call.1} parent=27 // pred_fallthru
          _
        %171 = sfence
        %p172 = pneg %p48
        %p173 = pneg %p45
        %s174 = sand.u32 %s63, 1
        %s175 = scalar_lea.sflag [#allocation5], %s174
        %s176 = sand.u32 %s63, 1
        %s177 = smul.addr %s176, 8
        %s178 = scalar_lea.vmem [#allocation8], %s177
        %p179 = pneg %p76
        %p180 = pneg %p73
        %p181 = pneg %p102
        %p182 = pneg %p99
        %s183 = sand.u32 %s89, 1
        %s184 = scalar_lea.sflag [#allocation6], %s183
        %s185 = sand.u32 %s89, 1
        %s186 = smul.addr %s185, 2
        %s187 = scalar_lea.vmem [#allocation9], %s186
        %p188 = scmp.eq.s32.totalorder %s25, 0
        // Predicated region
        $region37: #{tpu_custom_call.1} parent=27 // pred_check
          %p189 = pneg %p188
        $region38: #{tpu_custom_call.1} parent=27 // pred_check_branch
          %191 = sbr.rel (%p189) target = $region40
        $region39: #{tpu_custom_call.1} parent=27 // pred_region
          %192 = vst [vmem:[#allocation2] sm:$0xff] 0.0
          %193 = vst [vmem:[#allocation2 + $0x8] sm:$0xff] 0.0
          %194 = vst [vmem:[#allocation3] sm:$0xff] -inf
          %195 = vst [vmem:[#allocation3 + $0x8] sm:$0xff] -inf
        $region40: #{tpu_custom_call.1} parent=27 // pred_fallthru
          _
        %v196 = vld [vmem:[%s166] sm:$0xff]
        %v198 = vcombine.high %v196, %v196
        %vm200 = vcmask 1043456
        %v201 = vsel %vm200, %v196, 0.0
        %v202 = vrot.slane %v201, 4
        %v203 = vadd.f32 %v201, %v202
        %v204 = vrot.slane %v203, 2
        %v205 = vadd.f32 %v203, %v204
        %v206 = vrot.slane %v205, 1
        %v207 = vadd.f32 %v205, %v206
        %v208 = vsel %vm200, %v198, 0.0
        %v209 = vrot.slane %v208, 4
        %v210 = vadd.f32 %v208, %v209
        %v211 = vrot.slane %v210, 2
        %v212 = vadd.f32 %v210, %v211
        %v213 = vrot.slane %v212, 1
        %v214 = vadd.f32 %v212, %v213
        %v215 = vsel %vm200, %v196, -inf
        %v216 = vrot.slane %v215, 4
        %v217 = vmax.f32 %v215, %v216
        %v218 = vrot.slane %v217, 2
        %v219 = vmax.f32 %v217, %v218
        %v220 = vrot.slane %v219, 1
        %v221 = vmax.f32 %v219, %v220
        %v222 = vsel %vm200, %v198, -inf
        %v223 = vrot.slane %v222, 4
        %v224 = vmax.f32 %v222, %v223
        %v225 = vrot.slane %v224, 2
        %v226 = vmax.f32 %v224, %v225
        %v227 = vrot.slane %v226, 1
        %v228 = vmax.f32 %v226, %v227
        %v229 = vld [vmem:[#allocation2] ss:$8 sm:$0x3]
        %v232 = vcombine.low %v207, %v214
        %v234 = vunpack.c.l.s4 1966171168
        %v235 = vunpack.c.0.s8 %v234
        %v236 = vlaneseq
        %v237 = vshrl.u32 %v236, 7
        %v238 = vsub.s32 %v235, %v237
        %v239 = vrot.slane %v232, %v238
        %v241 = vunpack.c.l.s4 1966171168
        %v242 = vunpack.c.0.s8 %v241
        %v243 = vlaneseq
        %v244 = vshrl.u32 %v243, 7
        %v245 = vsub.s32 %v242, %v244
        %v246 = vrot.slane %v239, %v245
        %v248 = vadd.f32 %v229, %v246
        %v249 = vlaneseq
        %vm250 = vcmp.ge.s32.totalorder %v249, 0
        %vm251 = vcmp.lt.s32.totalorder %v249, 256
        %vm252 = vmand %vm250, %vm251
        %253 = vst.msk [vmem:[#allocation2] ss:$8 sm:$0x3] %vm252, %v248
        %254 = vst.msk [vmem:[#allocation2] ss:$8 sm:$0x0] %vm252, %v248
        %v255 = vld [vmem:[#allocation3] ss:$8 sm:$0x3]
        %v258 = vcombine.low %v221, %v228
        %v260 = vunpack.c.l.s4 1966171168
        %v261 = vunpack.c.0.s8 %v260
        %v262 = vlaneseq
        %v263 = vshrl.u32 %v262, 7
        %v264 = vsub.s32 %v261, %v263
        %v265 = vrot.slane %v258, %v264
        %v267 = vunpack.c.l.s4 1966171168
        %v268 = vunpack.c.0.s8 %v267
        %v269 = vlaneseq
        %v270 = vshrl.u32 %v269, 7
        %v271 = vsub.s32 %v268, %v270
        %v272 = vrot.slane %v265, %v271
        %v274 = vmax.f32 %v255, %v272
        %275 = vst.msk [vmem:[#allocation3] ss:$8 sm:$0x3] %vm252, %v274
        %276 = vst.msk [vmem:[#allocation3] ss:$8 sm:$0x0] %vm252, %v274
        // Predicated region
        $region41: #{tpu_custom_call.1} parent=27 // pred_check
          %p277 = pneg %p188
        $region42: #{tpu_custom_call.1} parent=27 // pred_check_branch
          %279 = sbr.rel (%p277) target = $region44
        $region43: #{tpu_custom_call.1} parent=27 // pred_region
          %v280 = vld [vmem:[#allocation2] sm:$0xff]
          %v281 = vld [vmem:[#allocation2 + $0x8] sm:$0xff]
          %v282 = vrot.slane %v280, 4
          %v283 = vadd.f32 %v280, %v282
          %v284 = vrot.slane %v283, 2
          %v285 = vadd.f32 %v283, %v284
          %v286 = vrot.slane %v285, 1
          %v287 = vadd.f32 %v285, %v286
          %v288 = vrot.slane %v281, 4
          %v289 = vadd.f32 %v281, %v288
          %v290 = vrot.slane %v289, 2
          %v291 = vadd.f32 %v289, %v290
          %v292 = vrot.slane %v291, 1
          %v293 = vadd.f32 %v291, %v292
          %v294 = vmul.f32 %v287, 0.25
          %v295 = vmul.f32 %v293, 0.25
          %v296 = vld [vmem:[#allocation3] sm:$0xff]
          %v297 = vld [vmem:[#allocation3 + $0x8] sm:$0xff]
          %v298 = vrot.slane %v296, 4
          %v299 = vmax.f32 %v296, %v298
          %v300 = vrot.slane %v299, 2
          %v301 = vmax.f32 %v299, %v300
          %v302 = vrot.slane %v301, 1
          %v303 = vmax.f32 %v301, %v302
          %v304 = vrot.slane %v297, 4
          %v305 = vmax.f32 %v297, %v304
          %v306 = vrot.slane %v305, 2
          %v307 = vmax.f32 %v305, %v306
          %v308 = vrot.slane %v307, 1
          %v309 = vmax.f32 %v307, %v308
          %312 = vrot.lane.b32.xlu0 %v294, 17
          %v313 = vpop.permute.xlu0 %312
          %314 = vrot.lane.b32.xlu0 %v295, 17
          %v315 = vpop.permute.xlu0 %314
          %vm316 = vcmask 138240
          %v317 = vsel %vm316, %v313, %v315
          %v321 = vsel %vm316, 0.0, %v313
          %v322 = vsel %vm316, %v315, 0.0
          %325 = vrot.lane.b32.xlu0 %v303, 17
          %v326 = vpop.permute.xlu0 %325
          %327 = vrot.lane.b32.xlu0 %v309, 17
          %v328 = vpop.permute.xlu0 %327
          %v329 = vsel %vm316, %v326, %v328
          %v333 = vsel %vm316, 0.0, %v326
          %v334 = vsel %vm316, %v328, 0.0
          %v335 = vlaneseq
          %v336 = vand.u32 %v335, 127
          %v337 = vadd.s32 %v336, 128
          %vm338 = vcmp.lt.s32.totalorder %v336, 0
          %v339 = vsub.s32 0, %v336
          %v340 = vsel %vm338, %v339, %v336
          %v341 = vshrl.u32 %v340, 4
          %v342 = vand.u32 %v340, 15
          %v343 = vsub.s32 0, %v342
          %v344 = vsel %vm338, %v343, %v342
          %vm345 = vcmp.lt.s32.totalorder %v337, 0
          %v346 = vsub.s32 0, %v337
          %v347 = vsel %vm345, %v346, %v337
          %v348 = vshrl.u32 %v347, 4
          %v349 = vand.u32 %v347, 15
          %v350 = vsub.s32 0, %v349
          %v351 = vsel %vm345, %v350, %v349
          %vm352 = vcmp.ne.s32.totalorder %v344, 0
          %vm353 = vcmp.ne.s32.totalorder %v351, 0
          %vm354 = vcmp.lt.s32.totalorder %v344, 0
          %vm355 = vcmp.lt.s32.totalorder %v351, 0
          %vm356 = vmand %vm354, %vm352
          %vm357 = vmand %vm355, %vm353
          %v358 = vadd.s32 %v344, 16
          %v359 = vadd.s32 %v351, 16
          %v360 = vsel %vm356, %v358, %v344
          %v361 = vsel %vm357, %v359, %v351
          %vm362 = vcmp.ge.s32.totalorder %v360, 1
          %vm363 = vcmp.ge.s32.totalorder %v361, 1
          %vm364 = vcmp.le.s32.totalorder %v360, 14
          %vm365 = vcmp.le.s32.totalorder %v361, 14
          %s366 = sld [smem:[#allocation4]]
          %s367 = sld [smem:[#allocation4 + $0x1]]
          %s368 = sld [smem:[#allocation4 + $0x2]]
          %s369 = sld [smem:[#allocation4 + $0x3]]
          %s370 = sld [smem:[#allocation4 + $0x4]]
          %s371 = sld [smem:[#allocation4 + $0x5]]
          %s372 = sld [smem:[#allocation4 + $0x6]]
          %s373 = sld [smem:[#allocation4 + $0x7]]
          %s374 = sld [smem:[#allocation4 + $0x8]]
          %s375 = sld [smem:[#allocation4 + $0x9]]
          %s376 = sld [smem:[#allocation4 + $0xa]]
          %s377 = sld [smem:[#allocation4 + $0xb]]
          %s378 = sld [smem:[#allocation4 + $0xc]]
          %s379 = sld [smem:[#allocation4 + $0xd]]
          %s380 = sld [smem:[#allocation4 + $0xe]]
          %s381 = sld [smem:[#allocation4 + $0xf]]
          %s382 = sld [smem:[#allocation4 + $0x10]]
          %s383 = sld [smem:[#allocation4 + $0x11]]
          %v384 = vstv %s366
          %v385 = vmul.f32 %v384, %v321
          %v386 = vmul.f32 %v384, %v317
          %v387 = vstv %s375
          %v388 = vmul.f32 %v387, %v333
          %v389 = vmul.f32 %v387, %v329
          %v390 = vadd.f32 %v385, %v388
          %v391 = vadd.f32 %v386, %v389
          %v392 = vsel %vm362, %v390, 0.0
          %v393 = vsel %vm363, %v391, 0.0
          %v394 = vadd.f32 %v392, 0.0
          %v395 = vadd.f32 %v393, 0.0
          %v396 = vstv %s367
          %v397 = vmul.f32 %v396, %v321
          %v398 = vmul.f32 %v396, %v317
          %v399 = vmul.f32 %v396, %v322
          %v400 = vstv %s376
          %v401 = vmul.f32 %v400, %v333
          %v402 = vmul.f32 %v400, %v329
          %v403 = vmul.f32 %v400, %v334
          %v404 = vadd.f32 %v397, %v401
          %v405 = vadd.f32 %v398, %v402
          %v406 = vadd.f32 %v399, %v403
          %410 = vrot.lane.b32.xlu0 %v404, 127
          %v411 = vpop.permute.xlu0 %410
          %412 = vrot.lane.b32.xlu0 %v405, 127
          %v413 = vpop.permute.xlu0 %412
          %414 = vrot.lane.b32.xlu0 %v406, 127
          %v415 = vpop.permute.xlu0 %414
          %vm416 = vcmask 1039360
          %v417 = vsel %vm416, %v411, %v413
          %v418 = vsel %vm416, %v413, %v415
          %v421 = vadd.f32 %v394, %v417
          %v422 = vadd.f32 %v395, %v418
          %v423 = vstv %s368
          %v424 = vmul.f32 %v423, %v321
          %v425 = vmul.f32 %v423, %v317
          %v426 = vmul.f32 %v423, %v322
          %v427 = vstv %s377
          %v428 = vmul.f32 %v427, %v333
          %v429 = vmul.f32 %v427, %v329
          %v430 = vmul.f32 %v427, %v334
          %v431 = vadd.f32 %v424, %v428
          %v432 = vadd.f32 %v425, %v429
          %v433 = vadd.f32 %v426, %v430
          %437 = vrot.lane.b32.xlu0 %v431, 126
          %v438 = vpop.permute.xlu0 %437
          %439 = vrot.lane.b32.xlu0 %v432, 126
          %v440 = vpop.permute.xlu0 %439
          %441 = vrot.lane.b32.xlu0 %v433, 126
          %v442 = vpop.permute.xlu0 %441
          %vm443 = vcmask 1031168
          %v444 = vsel %vm443, %v438, %v440
          %v445 = vsel %vm443, %v440, %v442
          %v448 = vsel %vm364, %v444, 0.0
          %v449 = vsel %vm365, %v445, 0.0
          %v450 = vadd.f32 %v421, %v448
          %v451 = vadd.f32 %v422, %v449
          %v452 = vstv %s369
          %v453 = vmul.f32 %v452, %v321
          %v454 = vmul.f32 %v452, %v317
          %v455 = vmul.f32 %v452, %v322
          %v456 = vstv %s378
          %v457 = vmul.f32 %v456, %v333
          %v458 = vmul.f32 %v456, %v329
          %v459 = vmul.f32 %v456, %v334
          %v460 = vadd.f32 %v453, %v457
          %v461 = vadd.f32 %v454, %v458
          %v462 = vadd.f32 %v455, %v459
          %466 = vrot.lane.b32.xlu0 %v460, 112
          %v467 = vpop.permute.xlu0 %466
          %468 = vrot.lane.b32.xlu0 %v461, 112
          %v469 = vpop.permute.xlu0 %468
          %470 = vrot.lane.b32.xlu0 %v462, 112
          %v471 = vpop.permute.xlu0 %470
          %vm472 = vcmask 916480
          %v473 = vsel %vm472, %v467, %v469
          %v474 = vsel %vm472, %v469, %v471
          %v477 = vsel %vm362, %v473, 0.0
          %v478 = vsel %vm363, %v474, 0.0
          %v479 = vadd.f32 %v450, %v477
          %v480 = vadd.f32 %v451, %v478
          %v481 = vstv %s370
          %v482 = vmul.f32 %v481, %v321
          %v483 = vmul.f32 %v481, %v317
          %v484 = vmul.f32 %v481, %v322
          %v485 = vstv %s379
          %v486 = vmul.f32 %v485, %v333
          %v487 = vmul.f32 %v485, %v329
          %v488 = vmul.f32 %v485, %v334
          %v489 = vadd.f32 %v482, %v486
          %v490 = vadd.f32 %v483, %v487
          %v491 = vadd.f32 %v484, %v488
          %495 = vrot.lane.b32.xlu0 %v489, 111
          %v496 = vpop.permute.xlu0 %495
          %497 = vrot.lane.b32.xlu0 %v490, 111
          %v498 = vpop.permute.xlu0 %497
          %499 = vrot.lane.b32.xlu0 %v491, 111
          %v500 = vpop.permute.xlu0 %499
          %vm501 = vcmask 908288
          %v502 = vsel %vm501, %v496, %v498
          %v503 = vsel %vm501, %v498, %v500
          %v506 = vadd.f32 %v479, %v502
          %v507 = vadd.f32 %v480, %v503
          %v508 = vstv %s371
          %v509 = vmul.f32 %v508, %v321
          %v510 = vmul.f32 %v508, %v317
          %v511 = vmul.f32 %v508, %v322
          %v512 = vstv %s380
          %v513 = vmul.f32 %v512, %v333
          %v514 = vmul.f32 %v512, %v329
          %v515 = vmul.f32 %v512, %v334
          %v516 = vadd.f32 %v509, %v513
          %v517 = vadd.f32 %v510, %v514
          %v518 = vadd.f32 %v511, %v515
          %522 = vrot.lane.b32.xlu0 %v516, 110
          %v523 = vpop.permute.xlu0 %522
          %524 = vrot.lane.b32.xlu0 %v517, 110
          %v525 = vpop.permute.xlu0 %524
          %526 = vrot.lane.b32.xlu0 %v518, 110
          %v527 = vpop.permute.xlu0 %526
          %vm528 = vcmask 900096
          %v529 = vsel %vm528, %v523, %v525
          %v530 = vsel %vm528, %v525, %v527
          %v533 = vsel %vm364, %v529, 0.0
          %v534 = vsel %vm365, %v530, 0.0
          %v535 = vadd.f32 %v506, %v533
          %v536 = vadd.f32 %v507, %v534
          %v537 = vstv %s372
          %v538 = vmul.f32 %v537, %v321
          %v539 = vmul.f32 %v537, %v317
          %v540 = vmul.f32 %v537, %v322
          %v541 = vstv %s381
          %v542 = vmul.f32 %v541, %v333
          %v543 = vmul.f32 %v541, %v329
          %v544 = vmul.f32 %v541, %v334
          %v545 = vadd.f32 %v538, %v542
          %v546 = vadd.f32 %v539, %v543
          %v547 = vadd.f32 %v540, %v544
          %551 = vrot.lane.b32.xlu0 %v545, 96
          %v552 = vpop.permute.xlu0 %551
          %553 = vrot.lane.b32.xlu0 %v546, 96
          %v554 = vpop.permute.xlu0 %553
          %555 = vrot.lane.b32.xlu0 %v547, 96
          %v556 = vpop.permute.xlu0 %555
          %vm557 = vcmask 785408
          %v558 = vsel %vm557, %v552, %v554
          %v559 = vsel %vm557, %v554, %v556
          %v562 = vsel %vm362, %v558, 0.0
          %v563 = vsel %vm363, %v559, 0.0
          %v564 = vadd.f32 %v535, %v562
          %v565 = vadd.f32 %v536, %v563
          %v566 = vstv %s373
          %v567 = vmul.f32 %v566, %v321
          %v568 = vmul.f32 %v566, %v317
          %v569 = vmul.f32 %v566, %v322
          %v570 = vstv %s382
          %v571 = vmul.f32 %v570, %v333
          %v572 = vmul.f32 %v570, %v329
          %v573 = vmul.f32 %v570, %v334
          %v574 = vadd.f32 %v567, %v571
          %v575 = vadd.f32 %v568, %v572
          %v576 = vadd.f32 %v569, %v573
          %580 = vrot.lane.b32.xlu0 %v574, 95
          %v581 = vpop.permute.xlu0 %580
          %582 = vrot.lane.b32.xlu0 %v575, 95
          %v583 = vpop.permute.xlu0 %582
          %584 = vrot.lane.b32.xlu0 %v576, 95
          %v585 = vpop.permute.xlu0 %584
          %vm586 = vcmask 777216
          %v587 = vsel %vm586, %v581, %v583
          %v588 = vsel %vm586, %v583, %v585
          %v591 = vadd.f32 %v564, %v587
          %v592 = vadd.f32 %v565, %v588
          %v593 = vstv %s374
          %v594 = vmul.f32 %v593, %v321
          %v595 = vmul.f32 %v593, %v317
          %v596 = vmul.f32 %v593, %v322
          %v597 = vstv %s383
          %v598 = vmul.f32 %v597, %v333
          %v599 = vmul.f32 %v597, %v329
          %v600 = vmul.f32 %v597, %v334
          %v601 = vadd.f32 %v594, %v598
          %v602 = vadd.f32 %v595, %v599
          %v603 = vadd.f32 %v596, %v600
          %607 = vrot.lane.b32.xlu0 %v601, 94
          %v608 = vpop.permute.xlu0 %607
          %609 = vrot.lane.b32.xlu0 %v602, 94
          %v610 = vpop.permute.xlu0 %609
          %611 = vrot.lane.b32.xlu0 %v603, 94
          %v612 = vpop.permute.xlu0 %611
          %vm613 = vcmask 769024
          %v614 = vsel %vm613, %v608, %v610
          %v615 = vsel %vm613, %v610, %v612
          %v618 = vsel %vm364, %v614, 0.0
          %v619 = vsel %vm365, %v615, 0.0
          %v620 = vadd.f32 %v591, %v618
          %v621 = vadd.f32 %v592, %v619
          %v622 = vxor.u32 %v620, 2147483648
          %v623 = vxor.u32 %v621, 2147483648
          %v624 = vmul.f32 %v622, 1.442695
          %v625 = vpow.pop %v624
          %v626 = vmul.f32 %v623, 1.442695
          %v627 = vpow.pop %v626
          %v628 = vadd.f32 %v625, 1.0
          %v629 = vadd.f32 %v627, 1.0
          %v630 = vrcp.pop %v628
          %v631 = vmul.f32 1.0, %v630
          %v632 = vrcp.pop %v629
          %v633 = vmul.f32 1.0, %v632
          %v636 = vcombine.low %v631, %v633
          %v638 = vunpack.c.l.s4 1966171168
          %v639 = vunpack.c.0.s8 %v638
          %v640 = vlaneseq
          %v641 = vshrl.u32 %v640, 7
          %v642 = vsub.s32 %v639, %v641
          %v643 = vrot.slane %v636, %v642
          %v645 = vunpack.c.l.s4 1966171168
          %v646 = vunpack.c.0.s8 %v645
          %v647 = vlaneseq
          %v648 = vshrl.u32 %v647, 7
          %v649 = vsub.s32 %v646, %v648
          %v650 = vrot.slane %v643, %v649
          %652 = vst.msk [vmem:[%s187] sm:$0x3] %vm252, %v650
        $region44: #{tpu_custom_call.1} parent=27 // pred_fallthru
          _
        %s653 = sand.u32 %s89, 1
        %s654 = scalar_lea.sflag [#allocation6], %s653
        %s655 = sand.u32 %s89, 1
        %s656 = smul.addr %s655, 2
        %s657 = scalar_lea.vmem [#allocation9], %s656
        // Predicated region
        $region45: #{tpu_custom_call.1} parent=27 // pred_check
          %p658 = pneg %p99
        $region46: #{tpu_custom_call.1} parent=27 // pred_check_branch
          %660 = sbr.rel (%p658) target = $region48
        $region47: #{tpu_custom_call.1} parent=27 // pred_region
          %s662 = ssub.s32 32, 32
          %663 = vsyncadd %s654, %s662
          %s664 = smul.addr %s24, 2
          %s665 = smul.addr %s664, 16
          %s666 = scalar_lea.hbm %s2, %s665
          %s668 = sshll.u32 %s657, 4
          %s669 = int_to_ptr.vmem [resolvable:$true] %s668
          %671 = dma.vmem_to_hbm [thread:$0]  %s669, 32, %s666, %s654
        $region48: #{tpu_custom_call.1} parent=27 // pred_fallthru
          _
      $region28: #{tpu_custom_call.1} parent=5 // pred_fallthru
        _
      %p672 = scmp.le.s32.totalorder 2, %s15
      // Predicated region
      $region49: #{tpu_custom_call.1} parent=5 // pred_check
        %p673 = pneg %p672
      $region50: #{tpu_custom_call.1} parent=5 // pred_check_branch
        %675 = sbr.rel (%p673) target = $region52
      $region51: #{tpu_custom_call.1} parent=5 // pred_region
        %s676 = ssub.s32 %s15, 2
        // Predicated region
        $region53: #{tpu_custom_call.1} parent=51 // pred_check
          %p677 = pneg %p105
        $region54: #{tpu_custom_call.1} parent=51 // pred_check_branch
          %679 = sbr.rel (%p677) target = $region56
        $region55: #{tpu_custom_call.1} parent=51 // pred_region
          %s680 = sand.u32 %s90, 1
          %s681 = scalar_lea.sflag [#allocation6], %s680
          %s682 = sand.u32 %s90, 1
          %s683 = smul.addr %s682, 2
          %s684 = scalar_lea.vmem [#allocation9], %s683
          %685 = dma.done %s681, 32
        $region56: #{tpu_custom_call.1} parent=51 // pred_fallthru
          _
      $region52: #{tpu_custom_call.1} parent=5 // pred_fallthru
        _
    $region6: #{tpu_custom_call.1} parent=1 // loop_footer
      %s19 = sadd.s32 1, %s15
    $region7: #{tpu_custom_call.1} parent=1 // loop_footer_branch
      %14 = sbr.rel target = $region3
    $region8: #{tpu_custom_call.1} parent=1 // loop_exit
      _
    %686 = vsyncpa [#allocation5], 1
    %s687 = scalar_lea.sflag [#allocation5], 1
    %688 = vsyncpa %s687, 1
    %689 = vsyncpa [#allocation6], 1
    %s690 = scalar_lea.sflag [#allocation6], 1
    %691 = vsyncpa %s690, 1
    %692 = vsyncpa [#allocation7], 1
    %s693 = scalar_lea.sflag [#allocation7], 1
    %694 = vsyncpa %s693, 1

</llo_original>
